<compile_context>
chip_gen: v7x
topology: tpu7x:2x2x1
jax: 0.10.0
libtpu: 0.0.40
codegen_flags: <defaults>
</compile_context>

<pallas_src>
import functools

import jax
import jax.numpy as jnp
from jax.experimental import pallas as pl
from jax.experimental.pallas import tpu as pltpu


def policy_net_kernel(x_ref, w1_ref, b1_ref, wh_ref, bh_ref, out_ref, *,
                      action_dim):
    x = x_ref[...]                       # (S, TB)   batch on lanes
    w1 = w1_ref[...]                     # (H, S)
    state_dim = x.shape[0]
    tb = x.shape[1]
    hidden_dim = w1.shape[0]

    # --- fc1 + ReLU on the VPU -------------------------------------------
    # K = state_dim is tiny, so a handful of outer-product MACs beats a
    # nearly-empty MXU systolic pass (static Python loop -> fully unrolled).
    h = jnp.broadcast_to(b1_ref[...], (hidden_dim, tb))      # (H, TB)
    for k in range(state_dim):
        h = h + w1[:, k:k + 1] * x[k:k + 1, :]
    h = jnp.maximum(h, 0.0)

    # --- fused mu|std head: single MXU matmul ------------------------------
    # (2A, H) @ (H, TB) -> (2A, TB); f32 accumulation.
    z = jnp.dot(wh_ref[...], h, preferred_element_type=jnp.float32) + bh_ref[...]

    # --- epilogue: static sublane-row split (lane-dense stores) ------------
    z_mu = z[:action_dim, :]
    z_std = z[action_dim:, :]
    out_ref[:action_dim, :] = 2.0 * jnp.tanh(z_mu)
    # numerically stable softplus: max(z, 0) + log1p(exp(-|z|))
    out_ref[action_dim:, :] = (jnp.maximum(z_std, 0.0)
                               + jnp.log1p(jnp.exp(-jnp.abs(z_std))))


def _pick_batch_tile(batch):
    """Lane-axis (batch) tile: one tile for small batches, >=2 lane-aligned
    tiles for large batches so both v7x TensorCores get work."""
    TB_MAX = 4096
    if batch <= 1024:
        return batch                      # equals full lane extent -> legal
    half = pl.cdiv(batch, 2)
    tb = ((half + 127) // 128) * 128      # lane-align to 128
    return min(tb, TB_MAX)


def policy_net_forward(x, w1_t, b1_t, wh_t, bh_t, action_dim):
    """Returns (mu, std) of shape (batch, action_dim).

    w1_t: (hidden, state), b1_t: (hidden, 1),
    wh_t = [Wmu; Wstd]: (2*action, hidden), bh_t: (2*action, 1).
    """
    batch, state_dim = x.shape
    hidden_dim = w1_t.shape[0]
    two_a = wh_t.shape[0]

    x_t = x.T                              # one-time transpose in the wrapper

    tb = _pick_batch_tile(batch)
    grid = (pl.cdiv(batch, tb),)

    flops = 2 * batch * (state_dim * hidden_dim + hidden_dim * two_a)
    transcendentals = 3 * batch * action_dim   # tanh + exp + log1p, halved width
    bytes_accessed = 4 * (x.size + w1_t.size + b1_t.size + wh_t.size
                          + bh_t.size + batch * two_a)

    fused_t = pl.pallas_call(
        functools.partial(policy_net_kernel, action_dim=action_dim),
        out_shape=jax.ShapeDtypeStruct((two_a, batch), jnp.float32),
        grid=grid,
        in_specs=[
            pl.BlockSpec((state_dim, tb), lambda i: (0, i)),           # x^T
            pl.BlockSpec((hidden_dim, state_dim), lambda i: (0, 0)),   # W1
            pl.BlockSpec((hidden_dim, 1), lambda i: (0, 0)),           # b1
            pl.BlockSpec((two_a, hidden_dim), lambda i: (0, 0)),       # W_heads
            pl.BlockSpec((two_a, 1), lambda i: (0, 0)),                # b_heads
        ],
        out_specs=pl.BlockSpec((two_a, tb), lambda i: (0, i)),
        compiler_params=pltpu.CompilerParams(
            dimension_semantics=("parallel",)),
        cost_estimate=pl.CostEstimate(
            flops=flops,
            transcendentals=transcendentals,
            bytes_accessed=bytes_accessed),
    )(x_t, w1_t, b1_t, wh_t, bh_t)

    # Contiguous row slices of the (2A, batch) result; transpose back only to
    # match the PyTorch (batch, action_dim) output convention.
    mu = fused_t[:action_dim, :].T
    std = fused_t[action_dim:, :].T
    return mu, std


def init_params(key, state_dim, hidden_dim, action_dim):
    # PyTorch Linear default init: U(-1/sqrt(fan_in), 1/sqrt(fan_in)).
    # Weights stored in torch layout [out, in]; head weights/biases
    # pre-concatenated once (amortized across every forward call).
    k1, k2, k3, k4, k5, k6 = jax.random.split(key, 6)
    lim1 = 1.0 / jnp.sqrt(state_dim)
    lim2 = 1.0 / jnp.sqrt(hidden_dim)
    w1_t = jax.random.uniform(k1, (hidden_dim, state_dim), jnp.float32, -lim1, lim1)
    b1_t = jax.random.uniform(k2, (hidden_dim, 1), jnp.float32, -lim1, lim1)
    wmu_t = jax.random.uniform(k3, (action_dim, hidden_dim), jnp.float32, -lim2, lim2)
    bmu_t = jax.random.uniform(k4, (action_dim, 1), jnp.float32, -lim2, lim2)
    wstd_t = jax.random.uniform(k5, (action_dim, hidden_dim), jnp.float32, -lim2, lim2)
    bstd_t = jax.random.uniform(k6, (action_dim, 1), jnp.float32, -lim2, lim2)
    wh_t = jnp.concatenate([wmu_t, wstd_t], axis=0)   # (2*action, hidden)
    bh_t = jnp.concatenate([bmu_t, bstd_t], axis=0)   # (2*action, 1)
    return (w1_t, b1_t, wh_t, bh_t), (wmu_t, bmu_t, wstd_t, bstd_t)


if __name__ == "__main__":
    # CartPole-v1 per the module setup: state_dim=4, action_dim=2, hidden=128.
    state_dim, hidden_dim, action_dim = 4, 128, 2
    batch = 8

    key = jax.random.PRNGKey(0)
    kx, kp = jax.random.split(key)
    x = jax.random.normal(kx, (batch, state_dim), dtype=jnp.float32)
    fused_params, raw_params = init_params(kp, state_dim, hidden_dim, action_dim)
    w1_t, b1_t, wh_t, bh_t = fused_params
    wmu_t, bmu_t, wstd_t, bstd_t = raw_params

    mu, std = policy_net_forward(x, w1_t, b1_t, wh_t, bh_t, action_dim)
    jax.block_until_ready((mu, std))

    # Pure-JAX reference check (unfused, matches the PyTorch forward).
    h_ref = jnp.maximum(x @ w1_t.T + b1_t.reshape(1, -1), 0.0)
    mu_ref = 2.0 * jnp.tanh(h_ref @ wmu_t.T + bmu_t.reshape(1, -1))
    std_ref = jax.nn.softplus(h_ref @ wstd_t.T + bstd_t.reshape(1, -1))

    assert mu.shape == (batch, action_dim) and std.shape == (batch, action_dim)
    assert jnp.allclose(mu, mu_ref, atol=1e-5, rtol=1e-5)
    assert jnp.allclose(std, std_ref, atol=1e-5, rtol=1e-5)
    assert bool(jnp.all(std > 0.0))

    print("KERNEL_OK")
</pallas_src>

<mosaic_0001>
module attributes {stable_mosaic.version = 11 : i64} {
  func.func @policy_net_kernel(%arg0: i32, %arg1: memref<4x8xf32, #tpu.memory_space<vmem>>, %arg2: memref<128x4xf32, #tpu.memory_space<vmem>>, %arg3: memref<128x1xf32, #tpu.memory_space<vmem>>, %arg4: memref<4x128xf32, #tpu.memory_space<vmem>>, %arg5: memref<4x1xf32, #tpu.memory_space<vmem>>, %arg6: memref<4x8xf32, #tpu.memory_space<vmem>>) attributes {dimension_semantics = [#tpu.dimension_semantics<parallel>], iteration_bounds = array<i64: 1>, scalar_prefetch = 0 : i64, scratch_operands = 0 : i64, tpu.core_type = #tpu.core_type<tc>, window_params = [{transform_indices = @transform_0, window_bounds = array<i64: 4, 8>}, {pipeline_mode = #tpu.pipeline_mode<synchronous>, transform_indices = @transform_1, window_bounds = array<i64: 128, 4>}, {pipeline_mode = #tpu.pipeline_mode<synchronous>, transform_indices = @transform_2, window_bounds = array<i64: 128, 1>}, {pipeline_mode = #tpu.pipeline_mode<synchronous>, transform_indices = @transform_3, window_bounds = array<i64: 4, 128>}, {pipeline_mode = #tpu.pipeline_mode<synchronous>, transform_indices = @transform_4, window_bounds = array<i64: 4, 1>}, {transform_indices = @transform_5, window_bounds = array<i64: 4, 8>}]} {
    %c0 = arith.constant 0 : index
    %c0_0 = arith.constant 0 : index
    %0 = vector.load %arg1[%c0, %c0_0] : memref<4x8xf32, #tpu.memory_space<vmem>>, vector<4x8xf32>
    %c0_1 = arith.constant 0 : index
    %c0_2 = arith.constant 0 : index
    %1 = vector.load %arg2[%c0_1, %c0_2] : memref<128x4xf32, #tpu.memory_space<vmem>>, vector<128x4xf32>
    %c0_3 = arith.constant 0 : index
    %c0_4 = arith.constant 0 : index
    %2 = vector.load %arg3[%c0_3, %c0_4] : memref<128x1xf32, #tpu.memory_space<vmem>>, vector<128x1xf32>
    %3 = vector.shape_cast %2 : vector<128x1xf32> to vector<128x1xf32>
    %4 = vector.broadcast %3 : vector<128x1xf32> to vector<128x8xf32>
    %5 = vector.extract_strided_slice %1 {offsets = [0, 0], sizes = [128, 1], strides = [1, 1]} : vector<128x4xf32> to vector<128x1xf32>
    %6 = vector.extract_strided_slice %0 {offsets = [0, 0], sizes = [1, 8], strides = [1, 1]} : vector<4x8xf32> to vector<1x8xf32>
    %7 = vector.broadcast %5 : vector<128x1xf32> to vector<128x8xf32>
    %8 = vector.broadcast %6 : vector<1x8xf32> to vector<128x8xf32>
    %9 = arith.mulf %7, %8 : vector<128x8xf32>
    %10 = arith.addf %4, %9 : vector<128x8xf32>
    %11 = vector.extract_strided_slice %1 {offsets = [0, 1], sizes = [128, 1], strides = [1, 1]} : vector<128x4xf32> to vector<128x1xf32>
    %12 = vector.extract_strided_slice %0 {offsets = [1, 0], sizes = [1, 8], strides = [1, 1]} : vector<4x8xf32> to vector<1x8xf32>
    %13 = vector.broadcast %11 : vector<128x1xf32> to vector<128x8xf32>
    %14 = vector.broadcast %12 : vector<1x8xf32> to vector<128x8xf32>
    %15 = arith.mulf %13, %14 : vector<128x8xf32>
    %16 = arith.addf %10, %15 : vector<128x8xf32>
    %17 = vector.extract_strided_slice %1 {offsets = [0, 2], sizes = [128, 1], strides = [1, 1]} : vector<128x4xf32> to vector<128x1xf32>
    %18 = vector.extract_strided_slice %0 {offsets = [2, 0], sizes = [1, 8], strides = [1, 1]} : vector<4x8xf32> to vector<1x8xf32>
    %19 = vector.broadcast %17 : vector<128x1xf32> to vector<128x8xf32>
    %20 = vector.broadcast %18 : vector<1x8xf32> to vector<128x8xf32>
    %21 = arith.mulf %19, %20 : vector<128x8xf32>
    %22 = arith.addf %16, %21 : vector<128x8xf32>
    %23 = vector.extract_strided_slice %1 {offsets = [0, 3], sizes = [128, 1], strides = [1, 1]} : vector<128x4xf32> to vector<128x1xf32>
    %24 = vector.extract_strided_slice %0 {offsets = [3, 0], sizes = [1, 8], strides = [1, 1]} : vector<4x8xf32> to vector<1x8xf32>
    %25 = vector.broadcast %23 : vector<128x1xf32> to vector<128x8xf32>
    %26 = vector.broadcast %24 : vector<1x8xf32> to vector<128x8xf32>
    %27 = arith.mulf %25, %26 : vector<128x8xf32>
    %28 = arith.addf %22, %27 : vector<128x8xf32>
    %cst = arith.constant 0.000000e+00 : f32
    %29 = vector.broadcast %cst : f32 to vector<128x8xf32>
    %30 = arith.maximumf %28, %29 : vector<128x8xf32>
    %c0_5 = arith.constant 0 : index
    %c0_6 = arith.constant 0 : index
    %31 = vector.load %arg4[%c0_5, %c0_6] : memref<4x128xf32, #tpu.memory_space<vmem>>, vector<4x128xf32>
    %cst_7 = arith.constant dense<0.000000e+00> : vector<4x8xf32>
    %32 = tpu.matmul %31, %30, %cst_7 {dimension_numbers = #tpu.dot_dimension_numbers<[1], [0], [0], [1], [0, 0, 1, 1], [], []>} : vector<4x128xf32>, vector<128x8xf32>, vector<4x8xf32> -> vector<4x8xf32>
    %c0_8 = arith.constant 0 : index
    %c0_9 = arith.constant 0 : index
    %33 = vector.load %arg5[%c0_8, %c0_9] : memref<4x1xf32, #tpu.memory_space<vmem>>, vector<4x1xf32>
    %34 = vector.broadcast %33 : vector<4x1xf32> to vector<4x8xf32>
    %35 = arith.addf %32, %34 : vector<4x8xf32>
    %36 = vector.extract_strided_slice %35 {offsets = [0, 0], sizes = [2, 8], strides = [1, 1]} : vector<4x8xf32> to vector<2x8xf32>
    %37 = vector.extract_strided_slice %35 {offsets = [2, 0], sizes = [2, 8], strides = [1, 1]} : vector<4x8xf32> to vector<2x8xf32>
    %38 = math.tanh %36 : vector<2x8xf32>
    %cst_10 = arith.constant 2.000000e+00 : f32
    %39 = vector.broadcast %cst_10 : f32 to vector<2x8xf32>
    %40 = arith.mulf %39, %38 : vector<2x8xf32>
    %c0_11 = arith.constant 0 : index
    %c0_12 = arith.constant 0 : index
    %41 = vector.load %arg6[%c0_11, %c0_12] : memref<4x8xf32, #tpu.memory_space<vmem>>, vector<2x8xf32>
    tpu.vector_store %arg6[%c0_11, %c0_12], %40 {strides = array<i32>} : memref<4x8xf32, #tpu.memory_space<vmem>>, vector<2x8xf32>,
    %cst_13 = arith.constant 0.000000e+00 : f32
    %42 = vector.broadcast %cst_13 : f32 to vector<2x8xf32>
    %43 = arith.maximumf %37, %42 : vector<2x8xf32>
    %44 = math.absf %37 : vector<2x8xf32>
    %cst_14 = arith.constant 0.000000e+00 : f32
    %45 = vector.broadcast %cst_14 : f32 to vector<2x8xf32>
    %46 = arith.subf %45, %44 : vector<2x8xf32>
    %47 = math.exp %46 : vector<2x8xf32>
    %48 = math.log1p %47 : vector<2x8xf32>
    %49 = arith.addf %43, %48 : vector<2x8xf32>
    %c2 = arith.constant 2 : index
    %c0_15 = arith.constant 0 : index
    %50 = vector.load %arg6[%c2, %c0_15] : memref<4x8xf32, #tpu.memory_space<vmem>>, vector<2x8xf32>
    tpu.vector_store %arg6[%c2, %c0_15], %49 {strides = array<i32>} : memref<4x8xf32, #tpu.memory_space<vmem>>, vector<2x8xf32>,
    return
  }
  func.func @transform_0(%arg0: i32) -> (i32, i32) {
    %c0_i32 = arith.constant 0 : i32
    %c0_i32_0 = arith.constant 0 : i32
    return %c0_i32, %arg0 : i32, i32
  }
  func.func @transform_1(%arg0: i32) -> (i32, i32) {
    %c0_i32 = arith.constant 0 : i32
    %c0_i32_0 = arith.constant 0 : i32
    %c0_i32_1 = arith.constant 0 : i32
    return %c0_i32, %c0_i32_0 : i32, i32
  }
  func.func @transform_2(%arg0: i32) -> (i32, i32) {
    %c0_i32 = arith.constant 0 : i32
    %c0_i32_0 = arith.constant 0 : i32
    %c0_i32_1 = arith.constant 0 : i32
    return %c0_i32, %c0_i32_0 : i32, i32
  }
  func.func @transform_3(%arg0: i32) -> (i32, i32) {
    %c0_i32 = arith.constant 0 : i32
    %c0_i32_0 = arith.constant 0 : i32
    %c0_i32_1 = arith.constant 0 : i32
    return %c0_i32, %c0_i32_0 : i32, i32
  }
  func.func @transform_4(%arg0: i32) -> (i32, i32) {
    %c0_i32 = arith.constant 0 : i32
    %c0_i32_0 = arith.constant 0 : i32
    %c0_i32_1 = arith.constant 0 : i32
    return %c0_i32, %c0_i32_0 : i32, i32
  }
  func.func @transform_5(%arg0: i32) -> (i32, i32) {
    %c0_i32 = arith.constant 0 : i32
    %c0_i32_0 = arith.constant 0 : i32
    return %c0_i32, %arg0 : i32, i32
  }
}

</mosaic_0001>

<llo_original>
// kernel: tpu_custom_call.1
$region0: #{tpu_custom_call.1}
  #allocation0 [shape = 'u32[]', space=smem, size = 0x4, offset = 0x4, fixed_abs, tag = 'smem constant byte address 0x4 - core index']
  #allocation1 [shape = 'u32[144,128]{1,0:T(1,128)}', space=vmem, size = 0x12000, scoped, tag = 'internal scratch']
  %s0 = inlined_call_operand.vmem [shape: f32[4,8], index: 0, kind: input, shape index: {}]
  %s1 = inlined_call_operand.vmem [shape: f32[128,4], index: 1, kind: input, shape index: {}]
  %s2 = inlined_call_operand.vmem [shape: f32[128,1], index: 2, kind: input, shape index: {}]
  %s3 = inlined_call_operand.vmem [shape: f32[4,128], index: 3, kind: input, shape index: {}]
  %s4 = inlined_call_operand.vmem [shape: f32[4,1], index: 4, kind: input, shape index: {}]
  %s5 = inlined_call_operand.hbm [shape: f32[4,8], index: 5, kind: output, shape index: {}]
  %s6 = sld [smem:[#allocation0]]
  $region30: #{tpu_custom_call.1} parent=0
    _
  %s8 = ssub.s32 1, %s6
  %s9 = scalar_select 0, %s8, %s6
  $region1: #{tpu_custom_call.1} parent=0
    #allocation2 [shape = 'u8[2048]{0}', space=vmem, size = 0x800, scoped, tag = 'output window, operand 0, single buffered']
    #allocation3 [shape = 's32[1]{0}', space=sflag, size = 0x4, scoped, tag = 'scoped memory for tpu_custom_call.1']
    %10 = vsyncpa [#allocation3], 0
    // Predicated region
    $region2: #{tpu_custom_call.1} parent=1 // pred_check
      _
    $region3: #{tpu_custom_call.1} parent=1 // pred_check_branch
      %12 = sbr.rel (0) target = $region5
    $region4: #{tpu_custom_call.1} parent=1 // pred_region
      _
    $region5: #{tpu_custom_call.1} parent=1 // pred_fallthru
      _
    // Predicated region
    $region6: #{tpu_custom_call.1} parent=1 // pred_check
      _
    $region7: #{tpu_custom_call.1} parent=1 // pred_check_branch
      %14 = sbr.rel (0) target = $region9
    $region8: #{tpu_custom_call.1} parent=1 // pred_region
      _
    $region9: #{tpu_custom_call.1} parent=1 // pred_fallthru
      _
    // Predicated region
    $region10: #{tpu_custom_call.1} parent=1 // pred_check
      _
    $region11: #{tpu_custom_call.1} parent=1 // pred_check_branch
      %16 = sbr.rel (0) target = $region13
    $region12: #{tpu_custom_call.1} parent=1 // pred_region
      _
    $region13: #{tpu_custom_call.1} parent=1 // pred_fallthru
      _
    // Predicated region
    $region14: #{tpu_custom_call.1} parent=1 // pred_check
      _
    $region15: #{tpu_custom_call.1} parent=1 // pred_check_branch
      %18 = sbr.rel (0) target = $region17
    $region16: #{tpu_custom_call.1} parent=1 // pred_region
      _
    $region17: #{tpu_custom_call.1} parent=1 // pred_fallthru
      _
    // Predicated region
    $region18: #{tpu_custom_call.1} parent=1 // pred_check
      _
    $region19: #{tpu_custom_call.1} parent=1 // pred_check_branch
      %20 = sbr.rel (0) target = $region21
    $region20: #{tpu_custom_call.1} parent=1 // pred_region
      _
    $region21: #{tpu_custom_call.1} parent=1 // pred_fallthru
      _
    %v21 = vld [vmem:[%s0] sm:$0xf]
    %v22 = vld [vmem:[%s1] sm:$0xff]
    %v23 = vld [vmem:[%s1 + $0x8] sm:$0xff]
    %v24 = vld [vmem:[%s1 + $0x10] sm:$0xff]
    %v25 = vld [vmem:[%s1 + $0x18] sm:$0xff]
    %v26 = vld [vmem:[%s1 + $0x20] sm:$0xff]
    %v27 = vld [vmem:[%s1 + $0x28] sm:$0xff]
    %v28 = vld [vmem:[%s1 + $0x30] sm:$0xff]
    %v29 = vld [vmem:[%s1 + $0x38] sm:$0xff]
    %v30 = vld [vmem:[%s1 + $0x40] sm:$0xff]
    %v31 = vld [vmem:[%s1 + $0x48] sm:$0xff]
    %v32 = vld [vmem:[%s1 + $0x50] sm:$0xff]
    %v33 = vld [vmem:[%s1 + $0x58] sm:$0xff]
    %v34 = vld [vmem:[%s1 + $0x60] sm:$0xff]
    %v35 = vld [vmem:[%s1 + $0x68] sm:$0xff]
    %v36 = vld [vmem:[%s1 + $0x70] sm:$0xff]
    %v37 = vld [vmem:[%s1 + $0x78] sm:$0xff]
    %v38 = vld [vmem:[%s2] sm:$0xff]
    %v39 = vld [vmem:[%s2 + $0x8] sm:$0xff]
    %v40 = vld [vmem:[%s2 + $0x10] sm:$0xff]
    %v41 = vld [vmem:[%s2 + $0x18] sm:$0xff]
    %v42 = vld [vmem:[%s2 + $0x20] sm:$0xff]
    %v43 = vld [vmem:[%s2 + $0x28] sm:$0xff]
    %v44 = vld [vmem:[%s2 + $0x30] sm:$0xff]
    %v45 = vld [vmem:[%s2 + $0x38] sm:$0xff]
    %v46 = vld [vmem:[%s2 + $0x40] sm:$0xff]
    %v47 = vld [vmem:[%s2 + $0x48] sm:$0xff]
    %v48 = vld [vmem:[%s2 + $0x50] sm:$0xff]
    %v49 = vld [vmem:[%s2 + $0x58] sm:$0xff]
    %v50 = vld [vmem:[%s2 + $0x60] sm:$0xff]
    %v51 = vld [vmem:[%s2 + $0x68] sm:$0xff]
    %v52 = vld [vmem:[%s2 + $0x70] sm:$0xff]
    %v53 = vld [vmem:[%s2 + $0x78] sm:$0xff]
    %55 = vset.pattern.permute.xlu0 0
    %56 = vperm.xlu0 %55, %v38
    %v57 = vpop.permute.xlu0 %56
    %60 = vset.pattern.permute.xlu0 0
    %61 = vperm.xlu0 %60, %v39
    %v62 = vpop.permute.xlu0 %61
    %65 = vset.pattern.permute.xlu0 0
    %66 = vperm.xlu0 %65, %v40
    %v67 = vpop.permute.xlu0 %66
    %70 = vset.pattern.permute.xlu0 0
    %71 = vperm.xlu0 %70, %v41
    %v72 = vpop.permute.xlu0 %71
    %75 = vset.pattern.permute.xlu0 0
    %76 = vperm.xlu0 %75, %v42
    %v77 = vpop.permute.xlu0 %76
    %80 = vset.pattern.permute.xlu0 0
    %81 = vperm.xlu0 %80, %v43
    %v82 = vpop.permute.xlu0 %81
    %85 = vset.pattern.permute.xlu0 0
    %86 = vperm.xlu0 %85, %v44
    %v87 = vpop.permute.xlu0 %86
    %90 = vset.pattern.permute.xlu0 0
    %91 = vperm.xlu0 %90, %v45
    %v92 = vpop.permute.xlu0 %91
    %95 = vset.pattern.permute.xlu0 0
    %96 = vperm.xlu0 %95, %v46
    %v97 = vpop.permute.xlu0 %96
    %100 = vset.pattern.permute.xlu0 0
    %101 = vperm.xlu0 %100, %v47
    %v102 = vpop.permute.xlu0 %101
    %105 = vset.pattern.permute.xlu0 0
    %106 = vperm.xlu0 %105, %v48
    %v107 = vpop.permute.xlu0 %106
    %110 = vset.pattern.permute.xlu0 0
    %111 = vperm.xlu0 %110, %v49
    %v112 = vpop.permute.xlu0 %111
    %115 = vset.pattern.permute.xlu0 0
    %116 = vperm.xlu0 %115, %v50
    %v117 = vpop.permute.xlu0 %116
    %120 = vset.pattern.permute.xlu0 0
    %121 = vperm.xlu0 %120, %v51
    %v122 = vpop.permute.xlu0 %121
    %125 = vset.pattern.permute.xlu0 0
    %126 = vperm.xlu0 %125, %v52
    %v127 = vpop.permute.xlu0 %126
    %130 = vset.pattern.permute.xlu0 0
    %131 = vperm.xlu0 %130, %v53
    %v132 = vpop.permute.xlu0 %131
    %135 = vset.pattern.permute.xlu0 0
    %136 = vperm.xlu0 %135, %v22
    %v137 = vpop.permute.xlu0 %136
    %140 = vset.pattern.permute.xlu0 0
    %141 = vperm.xlu0 %140, %v23
    %v142 = vpop.permute.xlu0 %141
    %145 = vset.pattern.permute.xlu0 0
    %146 = vperm.xlu0 %145, %v24
    %v147 = vpop.permute.xlu0 %146
    %150 = vset.pattern.permute.xlu0 0
    %151 = vperm.xlu0 %150, %v25
    %v152 = vpop.permute.xlu0 %151
    %155 = vset.pattern.permute.xlu0 0
    %156 = vperm.xlu0 %155, %v26
    %v157 = vpop.permute.xlu0 %156
    %160 = vset.pattern.permute.xlu0 0
    %161 = vperm.xlu0 %160, %v27
    %v162 = vpop.permute.xlu0 %161
    %165 = vset.pattern.permute.xlu0 0
    %166 = vperm.xlu0 %165, %v28
    %v167 = vpop.permute.xlu0 %166
    %170 = vset.pattern.permute.xlu0 0
    %171 = vperm.xlu0 %170, %v29
    %v172 = vpop.permute.xlu0 %171
    %175 = vset.pattern.permute.xlu0 0
    %176 = vperm.xlu0 %175, %v30
    %v177 = vpop.permute.xlu0 %176
    %180 = vset.pattern.permute.xlu0 0
    %181 = vperm.xlu0 %180, %v31
    %v182 = vpop.permute.xlu0 %181
    %185 = vset.pattern.permute.xlu0 0
    %186 = vperm.xlu0 %185, %v32
    %v187 = vpop.permute.xlu0 %186
    %190 = vset.pattern.permute.xlu0 0
    %191 = vperm.xlu0 %190, %v33
    %v192 = vpop.permute.xlu0 %191
    %195 = vset.pattern.permute.xlu0 0
    %196 = vperm.xlu0 %195, %v34
    %v197 = vpop.permute.xlu0 %196
    %200 = vset.pattern.permute.xlu0 0
    %201 = vperm.xlu0 %200, %v35
    %v202 = vpop.permute.xlu0 %201
    %205 = vset.pattern.permute.xlu0 0
    %206 = vperm.xlu0 %205, %v36
    %v207 = vpop.permute.xlu0 %206
    %210 = vset.pattern.permute.xlu0 0
    %211 = vperm.xlu0 %210, %v37
    %v212 = vpop.permute.xlu0 %211
    %v214 = vlaneseq
    %v215 = vshrl.u32 %v214, 7
    %v216 = vsub.s32 0, %v215
    %v217 = vrot.slane %v21, %v216
    %v218 = vmul.f32 %v137, %v217
    %v219 = vmul.f32 %v142, %v217
    %v220 = vmul.f32 %v147, %v217
    %v221 = vmul.f32 %v152, %v217
    %v222 = vmul.f32 %v157, %v217
    %v223 = vmul.f32 %v162, %v217
    %v224 = vmul.f32 %v167, %v217
    %v225 = vmul.f32 %v172, %v217
    %v226 = vmul.f32 %v177, %v217
    %v227 = vmul.f32 %v182, %v217
    %v228 = vmul.f32 %v187, %v217
    %v229 = vmul.f32 %v192, %v217
    %v230 = vmul.f32 %v197, %v217
    %v231 = vmul.f32 %v202, %v217
    %v232 = vmul.f32 %v207, %v217
    %v233 = vmul.f32 %v212, %v217
    %v234 = vadd.f32 %v57, %v218
    %v235 = vadd.f32 %v62, %v219
    %v236 = vadd.f32 %v67, %v220
    %v237 = vadd.f32 %v72, %v221
    %v238 = vadd.f32 %v77, %v222
    %v239 = vadd.f32 %v82, %v223
    %v240 = vadd.f32 %v87, %v224
    %v241 = vadd.f32 %v92, %v225
    %v242 = vadd.f32 %v97, %v226
    %v243 = vadd.f32 %v102, %v227
    %v244 = vadd.f32 %v107, %v228
    %v245 = vadd.f32 %v112, %v229
    %v246 = vadd.f32 %v117, %v230
    %v247 = vadd.f32 %v122, %v231
    %v248 = vadd.f32 %v127, %v232
    %v249 = vadd.f32 %v132, %v233
    %250 = vset.pattern.permute.xlu0 1
    %251 = vperm.xlu0 %250, %v22
    %v252 = vpop.permute.xlu0 %251
    %254 = vset.pattern.permute.xlu0 1
    %255 = vperm.xlu0 %254, %v23
    %v256 = vpop.permute.xlu0 %255
    %258 = vset.pattern.permute.xlu0 1
    %259 = vperm.xlu0 %258, %v24
    %v260 = vpop.permute.xlu0 %259
    %262 = vset.pattern.permute.xlu0 1
    %263 = vperm.xlu0 %262, %v25
    %v264 = vpop.permute.xlu0 %263
    %266 = vset.pattern.permute.xlu0 1
    %267 = vperm.xlu0 %266, %v26
    %v268 = vpop.permute.xlu0 %267
    %270 = vset.pattern.permute.xlu0 1
    %271 = vperm.xlu0 %270, %v27
    %v272 = vpop.permute.xlu0 %271
    %274 = vset.pattern.permute.xlu0 1
    %275 = vperm.xlu0 %274, %v28
    %v276 = vpop.permute.xlu0 %275
    %278 = vset.pattern.permute.xlu0 1
    %279 = vperm.xlu0 %278, %v29
    %v280 = vpop.permute.xlu0 %279
    %282 = vset.pattern.permute.xlu0 1
    %283 = vperm.xlu0 %282, %v30
    %v284 = vpop.permute.xlu0 %283
    %286 = vset.pattern.permute.xlu0 1
    %287 = vperm.xlu0 %286, %v31
    %v288 = vpop.permute.xlu0 %287
    %290 = vset.pattern.permute.xlu0 1
    %291 = vperm.xlu0 %290, %v32
    %v292 = vpop.permute.xlu0 %291
    %294 = vset.pattern.permute.xlu0 1
    %295 = vperm.xlu0 %294, %v33
    %v296 = vpop.permute.xlu0 %295
    %298 = vset.pattern.permute.xlu0 1
    %299 = vperm.xlu0 %298, %v34
    %v300 = vpop.permute.xlu0 %299
    %302 = vset.pattern.permute.xlu0 1
    %303 = vperm.xlu0 %302, %v35
    %v304 = vpop.permute.xlu0 %303
    %306 = vset.pattern.permute.xlu0 1
    %307 = vperm.xlu0 %306, %v36
    %v308 = vpop.permute.xlu0 %307
    %310 = vset.pattern.permute.xlu0 1
    %311 = vperm.xlu0 %310, %v37
    %v312 = vpop.permute.xlu0 %311
    %v314 = vlaneseq
    %v315 = vshrl.u32 %v314, 7
    %v316 = vsub.s32 1, %v315
    %v317 = vrot.slane %v21, %v316
    %v318 = vmul.f32 %v252, %v317
    %v319 = vmul.f32 %v256, %v317
    %v320 = vmul.f32 %v260, %v317
    %v321 = vmul.f32 %v264, %v317
    %v322 = vmul.f32 %v268, %v317
    %v323 = vmul.f32 %v272, %v317
    %v324 = vmul.f32 %v276, %v317
    %v325 = vmul.f32 %v280, %v317
    %v326 = vmul.f32 %v284, %v317
    %v327 = vmul.f32 %v288, %v317
    %v328 = vmul.f32 %v292, %v317
    %v329 = vmul.f32 %v296, %v317
    %v330 = vmul.f32 %v300, %v317
    %v331 = vmul.f32 %v304, %v317
    %v332 = vmul.f32 %v308, %v317
    %v333 = vmul.f32 %v312, %v317
    %v334 = vadd.f32 %v234, %v318
    %v335 = vadd.f32 %v235, %v319
    %v336 = vadd.f32 %v236, %v320
    %v337 = vadd.f32 %v237, %v321
    %v338 = vadd.f32 %v238, %v322
    %v339 = vadd.f32 %v239, %v323
    %v340 = vadd.f32 %v240, %v324
    %v341 = vadd.f32 %v241, %v325
    %v342 = vadd.f32 %v242, %v326
    %v343 = vadd.f32 %v243, %v327
    %v344 = vadd.f32 %v244, %v328
    %v345 = vadd.f32 %v245, %v329
    %v346 = vadd.f32 %v246, %v330
    %v347 = vadd.f32 %v247, %v331
    %v348 = vadd.f32 %v248, %v332
    %v349 = vadd.f32 %v249, %v333
    %350 = vset.pattern.permute.xlu0 2
    %351 = vperm.xlu0 %350, %v22
    %v352 = vpop.permute.xlu0 %351
    %354 = vset.pattern.permute.xlu0 2
    %355 = vperm.xlu0 %354, %v23
    %v356 = vpop.permute.xlu0 %355
    %358 = vset.pattern.permute.xlu0 2
    %359 = vperm.xlu0 %358, %v24
    %v360 = vpop.permute.xlu0 %359
    %362 = vset.pattern.permute.xlu0 2
    %363 = vperm.xlu0 %362, %v25
    %v364 = vpop.permute.xlu0 %363
    %366 = vset.pattern.permute.xlu0 2
    %367 = vperm.xlu0 %366, %v26
    %v368 = vpop.permute.xlu0 %367
    %370 = vset.pattern.permute.xlu0 2
    %371 = vperm.xlu0 %370, %v27
    %v372 = vpop.permute.xlu0 %371
    %374 = vset.pattern.permute.xlu0 2
    %375 = vperm.xlu0 %374, %v28
    %v376 = vpop.permute.xlu0 %375
    %378 = vset.pattern.permute.xlu0 2
    %379 = vperm.xlu0 %378, %v29
    %v380 = vpop.permute.xlu0 %379
    %382 = vset.pattern.permute.xlu0 2
    %383 = vperm.xlu0 %382, %v30
    %v384 = vpop.permute.xlu0 %383
    %386 = vset.pattern.permute.xlu0 2
    %387 = vperm.xlu0 %386, %v31
    %v388 = vpop.permute.xlu0 %387
    %390 = vset.pattern.permute.xlu0 2
    %391 = vperm.xlu0 %390, %v32
    %v392 = vpop.permute.xlu0 %391
    %394 = vset.pattern.permute.xlu0 2
    %395 = vperm.xlu0 %394, %v33
    %v396 = vpop.permute.xlu0 %395
    %398 = vset.pattern.permute.xlu0 2
    %399 = vperm.xlu0 %398, %v34
    %v400 = vpop.permute.xlu0 %399
    %402 = vset.pattern.permute.xlu0 2
    %403 = vperm.xlu0 %402, %v35
    %v404 = vpop.permute.xlu0 %403
    %406 = vset.pattern.permute.xlu0 2
    %407 = vperm.xlu0 %406, %v36
    %v408 = vpop.permute.xlu0 %407
    %410 = vset.pattern.permute.xlu0 2
    %411 = vperm.xlu0 %410, %v37
    %v412 = vpop.permute.xlu0 %411
    %v414 = vlaneseq
    %v415 = vshrl.u32 %v414, 7
    %v416 = vsub.s32 2, %v415
    %v417 = vrot.slane %v21, %v416
    %v418 = vmul.f32 %v352, %v417
    %v419 = vmul.f32 %v356, %v417
    %v420 = vmul.f32 %v360, %v417
    %v421 = vmul.f32 %v364, %v417
    %v422 = vmul.f32 %v368, %v417
    %v423 = vmul.f32 %v372, %v417
    %v424 = vmul.f32 %v376, %v417
    %v425 = vmul.f32 %v380, %v417
    %v426 = vmul.f32 %v384, %v417
    %v427 = vmul.f32 %v388, %v417
    %v428 = vmul.f32 %v392, %v417
    %v429 = vmul.f32 %v396, %v417
    %v430 = vmul.f32 %v400, %v417
    %v431 = vmul.f32 %v404, %v417
    %v432 = vmul.f32 %v408, %v417
    %v433 = vmul.f32 %v412, %v417
    %v434 = vadd.f32 %v334, %v418
    %v435 = vadd.f32 %v335, %v419
    %v436 = vadd.f32 %v336, %v420
    %v437 = vadd.f32 %v337, %v421
    %v438 = vadd.f32 %v338, %v422
    %v439 = vadd.f32 %v339, %v423
    %v440 = vadd.f32 %v340, %v424
    %v441 = vadd.f32 %v341, %v425
    %v442 = vadd.f32 %v342, %v426
    %v443 = vadd.f32 %v343, %v427
    %v444 = vadd.f32 %v344, %v428
    %v445 = vadd.f32 %v345, %v429
    %v446 = vadd.f32 %v346, %v430
    %v447 = vadd.f32 %v347, %v431
    %v448 = vadd.f32 %v348, %v432
    %v449 = vadd.f32 %v349, %v433
    %450 = vset.pattern.permute.xlu0 3
    %451 = vperm.xlu0 %450, %v22
    %v452 = vpop.permute.xlu0 %451
    %454 = vset.pattern.permute.xlu0 3
    %455 = vperm.xlu0 %454, %v23
    %v456 = vpop.permute.xlu0 %455
    %458 = vset.pattern.permute.xlu0 3
    %459 = vperm.xlu0 %458, %v24
    %v460 = vpop.permute.xlu0 %459
    %462 = vset.pattern.permute.xlu0 3
    %463 = vperm.xlu0 %462, %v25
    %v464 = vpop.permute.xlu0 %463
    %466 = vset.pattern.permute.xlu0 3
    %467 = vperm.xlu0 %466, %v26
    %v468 = vpop.permute.xlu0 %467
    %470 = vset.pattern.permute.xlu0 3
    %471 = vperm.xlu0 %470, %v27
    %v472 = vpop.permute.xlu0 %471
    %474 = vset.pattern.permute.xlu0 3
    %475 = vperm.xlu0 %474, %v28
    %v476 = vpop.permute.xlu0 %475
    %478 = vset.pattern.permute.xlu0 3
    %479 = vperm.xlu0 %478, %v29
    %v480 = vpop.permute.xlu0 %479
    %482 = vset.pattern.permute.xlu0 3
    %483 = vperm.xlu0 %482, %v30
    %v484 = vpop.permute.xlu0 %483
    %486 = vset.pattern.permute.xlu0 3
    %487 = vperm.xlu0 %486, %v31
    %v488 = vpop.permute.xlu0 %487
    %490 = vset.pattern.permute.xlu0 3
    %491 = vperm.xlu0 %490, %v32
    %v492 = vpop.permute.xlu0 %491
    %494 = vset.pattern.permute.xlu0 3
    %495 = vperm.xlu0 %494, %v33
    %v496 = vpop.permute.xlu0 %495
    %498 = vset.pattern.permute.xlu0 3
    %499 = vperm.xlu0 %498, %v34
    %v500 = vpop.permute.xlu0 %499
    %502 = vset.pattern.permute.xlu0 3
    %503 = vperm.xlu0 %502, %v35
    %v504 = vpop.permute.xlu0 %503
    %506 = vset.pattern.permute.xlu0 3
    %507 = vperm.xlu0 %506, %v36
    %v508 = vpop.permute.xlu0 %507
    %510 = vset.pattern.permute.xlu0 3
    %511 = vperm.xlu0 %510, %v37
    %v512 = vpop.permute.xlu0 %511
    %v514 = vlaneseq
    %v515 = vshrl.u32 %v514, 7
    %v516 = vsub.s32 3, %v515
    %v517 = vrot.slane %v21, %v516
    %v518 = vmul.f32 %v452, %v517
    %v519 = vmul.f32 %v456, %v517
    %v520 = vmul.f32 %v460, %v517
    %v521 = vmul.f32 %v464, %v517
    %v522 = vmul.f32 %v468, %v517
    %v523 = vmul.f32 %v472, %v517
    %v524 = vmul.f32 %v476, %v517
    %v525 = vmul.f32 %v480, %v517
    %v526 = vmul.f32 %v484, %v517
    %v527 = vmul.f32 %v488, %v517
    %v528 = vmul.f32 %v492, %v517
    %v529 = vmul.f32 %v496, %v517
    %v530 = vmul.f32 %v500, %v517
    %v531 = vmul.f32 %v504, %v517
    %v532 = vmul.f32 %v508, %v517
    %v533 = vmul.f32 %v512, %v517
    %v534 = vadd.f32 %v434, %v518
    %v535 = vadd.f32 %v435, %v519
    %v536 = vadd.f32 %v436, %v520
    %v537 = vadd.f32 %v437, %v521
    %v538 = vadd.f32 %v438, %v522
    %v539 = vadd.f32 %v439, %v523
    %v540 = vadd.f32 %v440, %v524
    %v541 = vadd.f32 %v441, %v525
    %v542 = vadd.f32 %v442, %v526
    %v543 = vadd.f32 %v443, %v527
    %v544 = vadd.f32 %v444, %v528
    %v545 = vadd.f32 %v445, %v529
    %v546 = vadd.f32 %v446, %v530
    %v547 = vadd.f32 %v447, %v531
    %v548 = vadd.f32 %v448, %v532
    %v549 = vadd.f32 %v449, %v533
    %v550 = vmax.f32 %v534, 0.0
    %v551 = vmax.f32 %v535, 0.0
    %v552 = vmax.f32 %v536, 0.0
    %v553 = vmax.f32 %v537, 0.0
    %v554 = vmax.f32 %v538, 0.0
    %v555 = vmax.f32 %v539, 0.0
    %v556 = vmax.f32 %v540, 0.0
    %v557 = vmax.f32 %v541, 0.0
    %v558 = vmax.f32 %v542, 0.0
    %v559 = vmax.f32 %v543, 0.0
    %v560 = vmax.f32 %v544, 0.0
    %v561 = vmax.f32 %v545, 0.0
    %v562 = vmax.f32 %v546, 0.0
    %v563 = vmax.f32 %v547, 0.0
    %v564 = vmax.f32 %v548, 0.0
    %v565 = vmax.f32 %v549, 0.0
    %v566 = vld [vmem:[%s3] sm:$0xf]
    %v567 = vld [vmem:[%s4] sm:$0xf]
    %569 = vset.pattern.permute.xlu0 0
    %570 = vperm.xlu0 %569, %v567
    %v571 = vpop.permute.xlu0 %570
    %573 = vmatprep.subr.mxu0 0.0
    %574 = vmatpush1.msra.mxu0 %v550
    %575 = vmatprep.subr.mxu0 0.0
    %576 = vmatpush1.msra.mxu0 %v551
    %577 = vmatprep.subr.mxu0 0.0
    %578 = vmatpush1.msra.mxu0 %v552
    %579 = vmatprep.subr.mxu0 0.0
    %580 = vmatpush1.msra.mxu0 %v553
    %581 = vmatprep.subr.mxu0 0.0
    %582 = vmatpush1.msra.mxu0 %v554
    %583 = vmatprep.subr.mxu0 0.0
    %584 = vmatpush1.msra.mxu0 %v555
    %585 = vmatprep.subr.mxu0 0.0
    %586 = vmatpush1.msra.mxu0 %v556
    %587 = vmatprep.subr.mxu0 0.0
    %588 = vmatpush1.msra.mxu0 %v557
    %589 = vmatprep.subr.mxu0 0.0
    %590 = vmatpush1.msra.mxu0 %v558
    %591 = vmatprep.subr.mxu0 0.0
    %592 = vmatpush1.msra.mxu0 %v559
    %593 = vmatprep.subr.mxu0 0.0
    %594 = vmatpush1.msra.mxu0 %v560
    %595 = vmatprep.subr.mxu0 0.0
    %596 = vmatpush1.msra.mxu0 %v561
    %597 = vmatprep.subr.mxu0 0.0
    %598 = vmatpush1.msra.mxu0 %v562
    %599 = vmatprep.subr.mxu0 0.0
    %600 = vmatpush1.msra.mxu0 %v563
    %601 = vmatprep.subr.mxu0 0.0
    %602 = vmatpush1.msra.mxu0 %v564
    %603 = vmatprep.subr.mxu0 0.0
    %604 = vmatpush1.msra.mxu0 %v565
    %605 = vmatprep.subr.mxu0 0.0
    %606 = vmatpush1.msra.mxu0 0.0
    %607 = vmatprep.subr.mxu0 0.0
    %608 = vmatpush1.msra.mxu0 0.0
    %609 = vmatprep.subr.mxu0 0.0
    %610 = vmatpush1.msra.mxu0 0.0
    %611 = vmatprep.subr.mxu0 0.0
    %612 = vmatpush1.msra.mxu0 0.0
    %613 = vmatprep.subr.mxu0 0.0
    %614 = vmatpush1.msra.mxu0 0.0
    %615 = vmatprep.subr.mxu0 0.0
    %616 = vmatpush1.msra.mxu0 0.0
    %617 = vmatprep.subr.mxu0 0.0
    %618 = vmatpush1.msra.mxu0 0.0
    %619 = vmatprep.subr.mxu0 0.0
    %620 = vmatpush1.msra.mxu0 0.0
    %621 = vmatprep.subr.mxu0 0.0
    %622 = vmatpush1.msra.mxu0 0.0
    %623 = vmatprep.subr.mxu0 0.0
    %624 = vmatpush1.msra.mxu0 0.0
    %625 = vmatprep.subr.mxu0 0.0
    %626 = vmatpush1.msra.mxu0 0.0
    %627 = vmatprep.subr.mxu0 0.0
    %628 = vmatpush1.msra.mxu0 0.0
    %629 = vmatprep.subr.mxu0 0.0
    %630 = vmatpush1.msra.mxu0 0.0
    %631 = vmatprep.subr.mxu0 0.0
    %632 = vmatpush1.msra.mxu0 0.0
    %633 = vmatprep.subr.mxu0 0.0
    %634 = vmatpush1.msra.mxu0 0.0
    %635 = vmatprep.subr.mxu0 0.0
    %636 = vmatpush1.msra.mxu0 0.0
    %637 = vmatprep.mubr.f32.mxu0 0.0
    %638 = vmatmul.mubr.f32.gmra.mrb[0].mxu0 %v566
    %v639 = vpop.f32.mrb[0].mxu0
    %v640 = vadd.f32 %v571, %v639
    %v641 = vpop.f32.mrb[0].mxu0
    %642 = vdwg.mxu0
    %v643 = vtanh.pop %v640
    %v644 = vmul.f32 %v643, 2.0
    %vm645 = vcmask 58368
    %646 = vst.msk [vmem:[#allocation2] sm:$0x3] %vm645, %v644
    %v647 = vmax.f32 %v640, 0.0
    %v648 = vand.u32 2147483647, %v640
    %v649 = vsub.f32 0.0, %v648
    %v650 = vmul.f32 %v649, 1.442695
    %v651 = vpow.pop %v650
    %v652 = vadd.f32 %v651, 1.0
    %v653 = vlog2.pop %v652
    %v654 = vmul.f32 %v653, 0.6931472
    %v655 = vmul.f32 -0.5, %v651
    %v656 = vadd.f32 %v655, 1.0
    %v657 = vmul.f32 %v656, %v651
    %v658 = vand.u32 2147483647, %v651
    %vm659 = vcmp.lt.f32.partialorder %v658, 0.0004427343
    %v660 = vsel %vm659, %v657, %v654
    %v661 = vadd.f32 %v647, %v660
    %vm662 = vcmask 60418
    %663 = vst.msk [vmem:[#allocation2] sm:$0xc] %vm662, %v661
    // Predicated region
    $region22: #{tpu_custom_call.1} parent=1 // pred_check
      _
    $region23: #{tpu_custom_call.1} parent=1 // pred_check_branch
      %665 = sbr.rel (0) target = $region25
    $region24: #{tpu_custom_call.1} parent=1 // pred_region
      %s667 = ssub.s32 64, 64
      %668 = vsyncadd [#allocation3], %s667
      %s670 = sshll.u32 [#allocation2], 4
      %s671 = int_to_ptr.vmem [resolvable:$true] %s670
      %673 = dma.vmem_to_hbm [thread:$0]  %s671, 64, %s5, [#allocation3]
    $region25: #{tpu_custom_call.1} parent=1 // pred_fallthru
      _
    // Predicated region
    $region26: #{tpu_custom_call.1} parent=1 // pred_check
      _
    $region27: #{tpu_custom_call.1} parent=1 // pred_check_branch
      %675 = sbr.rel (0) target = $region29
    $region28: #{tpu_custom_call.1} parent=1 // pred_region
      %676 = dma.done [#allocation3], 64
    $region29: #{tpu_custom_call.1} parent=1 // pred_fallthru
      _
    %677 = vsyncpa [#allocation3], 1

</llo_original>
